<compile_context>
chip_gen: v6e
topology: v6e:2x2x1
jax: 0.10.0
libtpu: 0.0.40
codegen_flags: <defaults>
</compile_context>

<pallas_src>
import functools
import math

import jax
import jax.numpy as jnp
from jax import lax
from jax.experimental import pallas as pl
from jax.experimental.pallas import tpu as pltpu


# -----------------------------------------------------------------------------
# Kernels
# -----------------------------------------------------------------------------

def _dwsep_vpu_kernel(body_ref, halo_ref, wdw_ref, wpw_ref, bias_ref, o_ref, *,
                      K, dilation, Wp, Lt, B_pack, C_in, C_out):
    """Exact f32 path: depthwise taps + pointwise as VPU broadcast-FMAs.

    body_ref: (1, B_pack*C_in, Lt)    row tile of the flat padded input
    halo_ref: (1, B_pack*C_in, Lh)    next `span` rows (+ tail), zero padded
    wdw_ref : (K*K, B_pack*C_in, 1)   depthwise weights (tiled over B_pack)
    wpw_ref : (C_out, C_in)           pointwise weights
    bias_ref: (C_out, 1)              folded bias (wpw @ b_dw + b_pw)
    o_ref   : (1, B_pack*C_out, Lt)   lane-dense output tile
    """
    x = jnp.concatenate([body_ref[0], halo_ref[0]], axis=-1).astype(jnp.float32)
    wdw = wdw_ref[...].astype(jnp.float32)            # (K*K, BC_in, 1)

    # Depthwise dilated conv (stride 1) in flat spatial space: each tap is a
    # contiguous lane-shifted slice; per-channel weight broadcasts over lanes.
    acc = jnp.zeros((B_pack * C_in, Lt), jnp.float32)
    tap = 0
    for kh in range(K):
        for kw in range(K):
            off = kh * dilation * Wp + kw * dilation
            acc = acc + x[:, off:off + Lt] * wdw[tap]
            tap += 1

    # Pointwise 1x1 conv per packed image (tiny C -> VPU broadcast-FMA; avoids
    # paying MXU drain latency for near-zero FLOPs).
    wpw = wpw_ref[...].astype(jnp.float32)
    bias = bias_ref[...].astype(jnp.float32)
    outs = []
    for b in range(B_pack):
        ob = jnp.zeros((C_out, Lt), jnp.float32)
        for ci in range(C_in):
            row = acc[b * C_in + ci:b * C_in + ci + 1, :]
            ob = ob + wpw[:, ci:ci + 1] * row
        outs.append(ob + bias)
    out = outs[0] if B_pack == 1 else jnp.concatenate(outs, axis=0)
    o_ref[0] = out.astype(o_ref.dtype)


def _dwsep_mxu_kernel(body_ref, halo_ref, weff_ref, bias_ref, o_ref, *,
                      K, dilation, Wp, Lt, C_in, C_out, mm_dtype):
    """bf16 path: depthwise + pointwise fused into ONE MXU matmul.

    weff_ref: (C_out, K*K*C_in) bf16, weff[co, t*C_in+ci] = wpw[co,ci]*wdw[ci,t]
    The kernel builds the (K*K*C_in, Lt) im2col from lane-shifted slices so the
    contraction dim is K*K*C_in (feeds the 256-wide MXU), bf16 x bf16 -> f32.
    """
    x = jnp.concatenate([body_ref[0], halo_ref[0]], axis=-1).astype(mm_dtype)
    cols = []
    for kh in range(K):
        for kw in range(K):
            off = kh * dilation * Wp + kw * dilation
            cols.append(x[:, off:off + Lt])
    col = jnp.concatenate(cols, axis=0)                         # (K*K*C_in, Lt)
    out = jnp.dot(weff_ref[...], col, preferred_element_type=jnp.float32)
    out = out + bias_ref[...].astype(jnp.float32)
    o_ref[0] = out.astype(o_ref.dtype)


# -----------------------------------------------------------------------------
# Wrapper
# -----------------------------------------------------------------------------

def _round_up(x, m):
    return -(-x // m) * m


def dilated_depthwise_separable_conv(x_nchw, w_dw, b_dw, w_pw, b_pw, *,
                                     stride=1, padding=0, dilation=1,
                                     row_block=None, prefer_mxu=None):
    """Forward pass matching the PyTorch module.

    x_nchw : (N, C_in, H, W)
    w_dw   : (C_in, 1, K, K)   depthwise (groups=C_in) weights, PyTorch layout
    b_dw   : (C_in,)
    w_pw   : (C_out, C_in, 1, 1)
    b_pw   : (C_out,)
    returns: (N, C_out, H_out, W_out)
    """
    N, C_in, H, W = x_nchw.shape
    K = w_dw.shape[-1]
    C_out = w_pw.shape[0]
    in_dt = x_nchw.dtype

    Hp, Wp = H + 2 * padding, W + 2 * padding
    span = dilation * (K - 1)
    H1, W1 = Hp - span, Wp - span          # stride-1 depthwise output extents
    assert H1 >= 1 and W1 >= 1, "kernel window does not fit the padded input"
    H_out = (Hp - span - 1) // stride + 1
    W_out = (Wp - span - 1) // stride + 1

    # ---- compute-path & sublane (batch) packing ------------------------------
    if prefer_mxu is None:
        use_mxu = (in_dt == jnp.bfloat16)   # never feed f32 operands to the MXU
    else:
        use_mxu = bool(prefer_mxu)
    B_pack = 1 if use_mxu else max(1, min(N, 8 // max(C_in, 1)))
    NB = -(-N // B_pack)
    BC_in, BC_out = B_pack * C_in, B_pack * C_out

    # ---- generation-aware VMEM budget ----------------------------------------
    try:
        cap = getattr(pltpu.get_tpu_info(), "vmem_capacity_bytes", None)
    except Exception:
        cap = None
    if not cap:
        cap = 64 * 1024 * 1024              # conservative (v7x-sized) fallback
    vmem_limit = int(cap) * 3 // 4          # leave headroom for compiler scratch

    # ---- row-tile size (TR stride-1 output rows per grid step) ---------------
    in_b = jnp.dtype(in_dt).itemsize
    q = 128 // math.gcd(Wp, 128)            # TR multiple of q -> TR*Wp % 128 == 0
    cdt = 2 if use_mxu else 4
    per_row = Wp * (2 * BC_in * in_b + 2 * BC_out * in_b + BC_in * cdt
                    + (K * K * C_in * 2 + BC_out * 4 if use_mxu
                       else BC_in * 4 + 2 * BC_out * 4))
    budget = min(24 << 20, vmem_limit // 2)
    if row_block is not None:
        TR = _round_up(max(1, row_block), q)
    else:
        TR = max(q, (budget // max(per_row, 1)) // q * q)
    if TR >= H1:
        TR, R = H1, 1                       # whole image per step (tiny images)
    else:
        R = -(-H1 // TR)
    Lt = TR * Wp

    # ---- input prep: one pad, free reshapes, no transposes -------------------
    # +1 extra zero row supplies the tail of the last tap's flat read.
    Rtot = R * TR + span + 1
    n_pad = NB * B_pack - N
    xp = jnp.pad(x_nchw, ((0, n_pad), (0, 0),
                          (padding, padding + (Rtot - Hp)), (padding, padding)))
    xp_flat = xp.reshape(NB * B_pack, C_in, Rtot * Wp)

    body = xp_flat[:, :, :R * TR * Wp].reshape(NB, BC_in, R * TR * Wp)

    halo_len = span * Wp + span
    Lh = max(128, _round_up(halo_len, 128))
    halos = [xp_flat[:, :, (r + 1) * TR * Wp:(r + 1) * TR * Wp + halo_len]
             for r in range(R)]
    halo = jnp.stack(halos, axis=2) if R > 1 else halos[0][:, :, None, :]
    halo = jnp.pad(halo, ((0, 0), (0, 0), (0, 0), (0, Lh - halo_len)))
    halo = halo.reshape(NB, BC_in, R * Lh)

    # ---- weight prep ----------------------------------------------------------
    wdw_base = jnp.transpose(w_dw[:, 0, :, :], (1, 2, 0)).reshape(K * K, C_in)
    wpw = w_pw.reshape(C_out, C_in).astype(jnp.float32)
    # Fold depthwise bias into the pointwise bias (pointwise is linear) - exact.
    bias_eff = (wpw @ b_dw.astype(jnp.float32)
                + b_pw.astype(jnp.float32)).reshape(C_out, 1)

    grid = (NB, R)
    body_spec = pl.BlockSpec((1, BC_in, Lt), lambda n, r: (n, 0, r))
    halo_spec = pl.BlockSpec((1, BC_in, Lh), lambda n, r: (n, 0, r))
    out_spec = pl.BlockSpec((1, BC_out, Lt), lambda n, r: (n, 0, r))
    cparams = pltpu.CompilerParams(
        dimension_semantics=("parallel", "parallel"),  # shard across v7x TCs
        vmem_limit_bytes=vmem_limit)

    if use_mxu:
        mm_dtype = jnp.bfloat16
        weff = (wpw[:, None, :] * wdw_base[None, :, :].astype(jnp.float32))
        weff = weff.reshape(C_out, K * K * C_in).astype(mm_dtype)
        kern = functools.partial(_dwsep_mxu_kernel, K=K, dilation=dilation,
                                 Wp=Wp, Lt=Lt, C_in=C_in, C_out=C_out,
                                 mm_dtype=mm_dtype)
        in_specs = [body_spec, halo_spec,
                    pl.BlockSpec((C_out, K * K * C_in), lambda n, r: (0, 0)),
                    pl.BlockSpec((C_out, 1), lambda n, r: (0, 0))]
        operands = (body, halo, weff, bias_eff)
    else:
        wdw_packed = jnp.tile(wdw_base.reshape(K * K, C_in, 1), (1, B_pack, 1))
        kern = functools.partial(_dwsep_vpu_kernel, K=K, dilation=dilation,
                                 Wp=Wp, Lt=Lt, B_pack=B_pack, C_in=C_in,
                                 C_out=C_out)
        in_specs = [body_spec, halo_spec,
                    pl.BlockSpec((K * K, BC_in, 1), lambda n, r: (0, 0, 0)),
                    pl.BlockSpec((C_out, C_in), lambda n, r: (0, 0)),
                    pl.BlockSpec((C_out, 1), lambda n, r: (0, 0))]
        operands = (body, halo, wdw_packed, wpw, bias_eff)

    out_flat = pl.pallas_call(
        kern,
        out_shape=jax.ShapeDtypeStruct((NB, BC_out, R * Lt), in_dt),
        grid_spec=pltpu.PrefetchScalarGridSpec(
            num_scalar_prefetch=0, grid=grid,
            in_specs=in_specs, out_specs=out_spec),
        compiler_params=cparams,
    )(*operands)

    # Free reshape back to images; one crop drops the span garbage columns,
    # padded rows / batch, and applies the stride (wrapper subsampling).
    ow = out_flat.reshape(NB * B_pack, C_out, R * TR, Wp)
    out = ow[:N, :,
             :(H_out - 1) * stride + 1:stride,
             :(W_out - 1) * stride + 1:stride]
    return out


# -----------------------------------------------------------------------------
# Reference + tests
# -----------------------------------------------------------------------------

def _reference(x, w_dw, b_dw, w_pw, b_pw, *, stride, padding, dilation):
    C_in = x.shape[1]
    dw = lax.conv_general_dilated(
        x, w_dw, window_strides=(stride, stride),
        padding=((padding, padding), (padding, padding)),
        rhs_dilation=(dilation, dilation),
        dimension_numbers=("NCHW", "OIHW", "NCHW"),
        feature_group_count=C_in)
    dw = dw + b_dw.reshape(1, -1, 1, 1)
    pw = lax.conv_general_dilated(
        dw, w_pw, window_strides=(1, 1), padding="VALID",
        dimension_numbers=("NCHW", "OIHW", "NCHW"))
    return pw + b_pw.reshape(1, -1, 1, 1)


def _make_params(key, C_in, C_out, K):
    k1, k2, k3, k4 = jax.random.split(key, 4)
    bound_dw = 1.0 / (K * K) ** 0.5
    w_dw = jax.random.uniform(k1, (C_in, 1, K, K), jnp.float32, -bound_dw, bound_dw)
    b_dw = jax.random.uniform(k2, (C_in,), jnp.float32, -bound_dw, bound_dw)
    bound_pw = 1.0 / C_in ** 0.5
    w_pw = jax.random.uniform(k3, (C_out, C_in, 1, 1), jnp.float32, -bound_pw, bound_pw)
    b_pw = jax.random.uniform(k4, (C_out,), jnp.float32, -bound_pw, bound_pw)
    return w_dw, b_dw, w_pw, b_pw


def _check(name, x, w_dw, b_dw, w_pw, b_pw, *, stride, padding, dilation,
           row_block=None, atol=1e-4, rtol=1e-4):
    out = dilated_depthwise_separable_conv(
        x, w_dw, b_dw, w_pw, b_pw, stride=stride, padding=padding,
        dilation=dilation, row_block=row_block)
    out = jax.block_until_ready(out)
    ref = _reference(x.astype(jnp.float32), w_dw, b_dw, w_pw, b_pw,
                     stride=stride, padding=padding, dilation=dilation)
    ref = jax.block_until_ready(ref)
    assert out.shape == ref.shape, (name, out.shape, ref.shape)
    outf = out.astype(jnp.float32)
    err = float(jnp.max(jnp.abs(outf - ref)))
    assert jnp.allclose(outf, ref, atol=atol, rtol=rtol), (name, err)


if __name__ == "__main__":
    key = jax.random.PRNGKey(0)
    kx1, kp1, kx2, kp2, kx3, kp3 = jax.random.split(key, 6)

    # 1) Module-spec shapes: f32 exact VPU path, whole image per step,
    #    batch packed 2-per-step into sublanes (C_in=4 -> B_pack=2).
    x1 = jax.random.normal(kx1, (2, 4, 16, 16), jnp.float32)
    p1 = _make_params(kp1, 4, 8, 3)
    _check("small_f32", x1, *p1, stride=1, padding=1, dilation=2)

    # 2) Row-tiled path (grid over row blocks with halo DMA blocks), stride 2.
    x2 = jax.random.normal(kx2, (2, 4, 62, 62), jnp.float32)
    p2 = _make_params(kp2, 4, 8, 3)
    _check("row_tiled_f32", x2, *p2, stride=2, padding=1, dilation=2,
           row_block=16)

    # 3) bf16: fused depthwise+pointwise im2col matmul on the MXU.
    x3 = jax.random.normal(kx3, (2, 8, 16, 16), jnp.float32).astype(jnp.bfloat16)
    p3 = _make_params(kp3, 8, 16, 3)
    _check("mxu_bf16", x3, *p3, stride=1, padding=2, dilation=1,
           atol=0.08, rtol=0.08)

    print("KERNEL_OK")
</pallas_src>

<mosaic_0001>
module attributes {stable_mosaic.version = 11 : i64} {
  func.func @_dwsep_vpu_kernel(%arg0: i32, %arg1: i32, %arg2: memref<1x8x252xf32, #tpu.memory_space<vmem>>, %arg3: memref<1x8x128xf32, #tpu.memory_space<vmem>>, %arg4: memref<9x8x1xf32, #tpu.memory_space<vmem>>, %arg5: memref<8x4xf32, #tpu.memory_space<vmem>>, %arg6: memref<8x1xf32, #tpu.memory_space<vmem>>, %arg7: memref<1x16x252xf32, #tpu.memory_space<vmem>>) attributes {dimension_semantics = [#tpu.dimension_semantics<parallel>, #tpu.dimension_semantics<parallel>], iteration_bounds = array<i64: 1, 1>, scalar_prefetch = 0 : i64, scratch_operands = 0 : i64, tpu.core_type = #tpu.core_type<tc>, window_params = [{transform_indices = @transform_0, window_bounds = array<i64: 1, 8, 252>}, {transform_indices = @transform_1, window_bounds = array<i64: 1, 8, 128>}, {pipeline_mode = #tpu.pipeline_mode<synchronous>, transform_indices = @transform_2, window_bounds = array<i64: 9, 8, 1>}, {pipeline_mode = #tpu.pipeline_mode<synchronous>, transform_indices = @transform_3, window_bounds = array<i64: 8, 4>}, {pipeline_mode = #tpu.pipeline_mode<synchronous>, transform_indices = @transform_4, window_bounds = array<i64: 8, 1>}, {transform_indices = @transform_5, window_bounds = array<i64: 1, 16, 252>}]} {
    %c0 = arith.constant 0 : index
    %c0_0 = arith.constant 0 : index
    %c0_1 = arith.constant 0 : index
    %0 = vector.load %arg2[%c0, %c0_0, %c0_1] : memref<1x8x252xf32, #tpu.memory_space<vmem>>, vector<1x8x252xf32>
    %1 = vector.shape_cast %0 : vector<1x8x252xf32> to vector<8x252xf32>
    %c0_2 = arith.constant 0 : index
    %c0_3 = arith.constant 0 : index
    %c0_4 = arith.constant 0 : index
    %2 = vector.load %arg3[%c0_2, %c0_3, %c0_4] : memref<1x8x128xf32, #tpu.memory_space<vmem>>, vector<1x8x128xf32>
    %3 = vector.shape_cast %2 : vector<1x8x128xf32> to vector<8x128xf32>
    %4 = tpu.concatenate %1, %3 in 1 : vector<8x252xf32>, vector<8x128xf32> -> vector<8x380xf32>
    %c0_5 = arith.constant 0 : index
    %c0_6 = arith.constant 0 : index
    %c0_7 = arith.constant 0 : index
    %5 = vector.load %arg4[%c0_5, %c0_6, %c0_7] : memref<9x8x1xf32, #tpu.memory_space<vmem>>, vector<9x8x1xf32>
    %cst = arith.constant 0.000000e+00 : f32
    %6 = vector.broadcast %cst : f32 to vector<8x252xf32>
    %7 = vector.extract_strided_slice %4 {offsets = [0, 0], sizes = [8, 252], strides = [1, 1]} : vector<8x380xf32> to vector<8x252xf32>
    %8 = vector.extract_strided_slice %5 {offsets = [0, 0, 0], sizes = [1, 8, 1], strides = [1, 1, 1]} : vector<9x8x1xf32> to vector<1x8x1xf32>
    %9 = vector.shape_cast %8 : vector<1x8x1xf32> to vector<8x1xf32>
    %10 = vector.broadcast %9 : vector<8x1xf32> to vector<8x252xf32>
    %11 = arith.mulf %7, %10 : vector<8x252xf32>
    %12 = arith.addf %6, %11 : vector<8x252xf32>
    %13 = vector.extract_strided_slice %4 {offsets = [0, 2], sizes = [8, 252], strides = [1, 1]} : vector<8x380xf32> to vector<8x252xf32>
    %14 = vector.extract_strided_slice %5 {offsets = [1, 0, 0], sizes = [1, 8, 1], strides = [1, 1, 1]} : vector<9x8x1xf32> to vector<1x8x1xf32>
    %15 = vector.shape_cast %14 : vector<1x8x1xf32> to vector<8x1xf32>
    %16 = vector.broadcast %15 : vector<8x1xf32> to vector<8x252xf32>
    %17 = arith.mulf %13, %16 : vector<8x252xf32>
    %18 = arith.addf %12, %17 : vector<8x252xf32>
    %19 = vector.extract_strided_slice %4 {offsets = [0, 4], sizes = [8, 252], strides = [1, 1]} : vector<8x380xf32> to vector<8x252xf32>
    %20 = vector.extract_strided_slice %5 {offsets = [2, 0, 0], sizes = [1, 8, 1], strides = [1, 1, 1]} : vector<9x8x1xf32> to vector<1x8x1xf32>
    %21 = vector.shape_cast %20 : vector<1x8x1xf32> to vector<8x1xf32>
    %22 = vector.broadcast %21 : vector<8x1xf32> to vector<8x252xf32>
    %23 = arith.mulf %19, %22 : vector<8x252xf32>
    %24 = arith.addf %18, %23 : vector<8x252xf32>
    %25 = vector.extract_strided_slice %4 {offsets = [0, 36], sizes = [8, 252], strides = [1, 1]} : vector<8x380xf32> to vector<8x252xf32>
    %26 = vector.extract_strided_slice %5 {offsets = [3, 0, 0], sizes = [1, 8, 1], strides = [1, 1, 1]} : vector<9x8x1xf32> to vector<1x8x1xf32>
    %27 = vector.shape_cast %26 : vector<1x8x1xf32> to vector<8x1xf32>
    %28 = vector.broadcast %27 : vector<8x1xf32> to vector<8x252xf32>
    %29 = arith.mulf %25, %28 : vector<8x252xf32>
    %30 = arith.addf %24, %29 : vector<8x252xf32>
    %31 = vector.extract_strided_slice %4 {offsets = [0, 38], sizes = [8, 252], strides = [1, 1]} : vector<8x380xf32> to vector<8x252xf32>
    %32 = vector.extract_strided_slice %5 {offsets = [4, 0, 0], sizes = [1, 8, 1], strides = [1, 1, 1]} : vector<9x8x1xf32> to vector<1x8x1xf32>
    %33 = vector.shape_cast %32 : vector<1x8x1xf32> to vector<8x1xf32>
    %34 = vector.broadcast %33 : vector<8x1xf32> to vector<8x252xf32>
    %35 = arith.mulf %31, %34 : vector<8x252xf32>
    %36 = arith.addf %30, %35 : vector<8x252xf32>
    %37 = vector.extract_strided_slice %4 {offsets = [0, 40], sizes = [8, 252], strides = [1, 1]} : vector<8x380xf32> to vector<8x252xf32>
    %38 = vector.extract_strided_slice %5 {offsets = [5, 0, 0], sizes = [1, 8, 1], strides = [1, 1, 1]} : vector<9x8x1xf32> to vector<1x8x1xf32>
    %39 = vector.shape_cast %38 : vector<1x8x1xf32> to vector<8x1xf32>
    %40 = vector.broadcast %39 : vector<8x1xf32> to vector<8x252xf32>
    %41 = arith.mulf %37, %40 : vector<8x252xf32>
    %42 = arith.addf %36, %41 : vector<8x252xf32>
    %43 = vector.extract_strided_slice %4 {offsets = [0, 72], sizes = [8, 252], strides = [1, 1]} : vector<8x380xf32> to vector<8x252xf32>
    %44 = vector.extract_strided_slice %5 {offsets = [6, 0, 0], sizes = [1, 8, 1], strides = [1, 1, 1]} : vector<9x8x1xf32> to vector<1x8x1xf32>
    %45 = vector.shape_cast %44 : vector<1x8x1xf32> to vector<8x1xf32>
    %46 = vector.broadcast %45 : vector<8x1xf32> to vector<8x252xf32>
    %47 = arith.mulf %43, %46 : vector<8x252xf32>
    %48 = arith.addf %42, %47 : vector<8x252xf32>
    %49 = vector.extract_strided_slice %4 {offsets = [0, 74], sizes = [8, 252], strides = [1, 1]} : vector<8x380xf32> to vector<8x252xf32>
    %50 = vector.extract_strided_slice %5 {offsets = [7, 0, 0], sizes = [1, 8, 1], strides = [1, 1, 1]} : vector<9x8x1xf32> to vector<1x8x1xf32>
    %51 = vector.shape_cast %50 : vector<1x8x1xf32> to vector<8x1xf32>
    %52 = vector.broadcast %51 : vector<8x1xf32> to vector<8x252xf32>
    %53 = arith.mulf %49, %52 : vector<8x252xf32>
    %54 = arith.addf %48, %53 : vector<8x252xf32>
    %55 = vector.extract_strided_slice %4 {offsets = [0, 76], sizes = [8, 252], strides = [1, 1]} : vector<8x380xf32> to vector<8x252xf32>
    %56 = vector.extract_strided_slice %5 {offsets = [8, 0, 0], sizes = [1, 8, 1], strides = [1, 1, 1]} : vector<9x8x1xf32> to vector<1x8x1xf32>
    %57 = vector.shape_cast %56 : vector<1x8x1xf32> to vector<8x1xf32>
    %58 = vector.broadcast %57 : vector<8x1xf32> to vector<8x252xf32>
    %59 = arith.mulf %55, %58 : vector<8x252xf32>
    %60 = arith.addf %54, %59 : vector<8x252xf32>
    %c0_8 = arith.constant 0 : index
    %c0_9 = arith.constant 0 : index
    %61 = vector.load %arg5[%c0_8, %c0_9] : memref<8x4xf32, #tpu.memory_space<vmem>>, vector<8x4xf32>
    %c0_10 = arith.constant 0 : index
    %c0_11 = arith.constant 0 : index
    %62 = vector.load %arg6[%c0_10, %c0_11] : memref<8x1xf32, #tpu.memory_space<vmem>>, vector<8x1xf32>
    %cst_12 = arith.constant 0.000000e+00 : f32
    %63 = vector.broadcast %cst_12 : f32 to vector<8x252xf32>
    %64 = vector.extract_strided_slice %60 {offsets = [0, 0], sizes = [1, 252], strides = [1, 1]} : vector<8x252xf32> to vector<1x252xf32>
    %65 = vector.extract_strided_slice %61 {offsets = [0, 0], sizes = [8, 1], strides = [1, 1]} : vector<8x4xf32> to vector<8x1xf32>
    %66 = vector.broadcast %65 : vector<8x1xf32> to vector<8x252xf32>
    %67 = vector.broadcast %64 : vector<1x252xf32> to vector<8x252xf32>
    %68 = arith.mulf %66, %67 : vector<8x252xf32>
    %69 = arith.addf %63, %68 : vector<8x252xf32>
    %70 = vector.extract_strided_slice %60 {offsets = [1, 0], sizes = [1, 252], strides = [1, 1]} : vector<8x252xf32> to vector<1x252xf32>
    %71 = vector.extract_strided_slice %61 {offsets = [0, 1], sizes = [8, 1], strides = [1, 1]} : vector<8x4xf32> to vector<8x1xf32>
    %72 = vector.broadcast %71 : vector<8x1xf32> to vector<8x252xf32>
    %73 = vector.broadcast %70 : vector<1x252xf32> to vector<8x252xf32>
    %74 = arith.mulf %72, %73 : vector<8x252xf32>
    %75 = arith.addf %69, %74 : vector<8x252xf32>
    %76 = vector.extract_strided_slice %60 {offsets = [2, 0], sizes = [1, 252], strides = [1, 1]} : vector<8x252xf32> to vector<1x252xf32>
    %77 = vector.extract_strided_slice %61 {offsets = [0, 2], sizes = [8, 1], strides = [1, 1]} : vector<8x4xf32> to vector<8x1xf32>
    %78 = vector.broadcast %77 : vector<8x1xf32> to vector<8x252xf32>
    %79 = vector.broadcast %76 : vector<1x252xf32> to vector<8x252xf32>
    %80 = arith.mulf %78, %79 : vector<8x252xf32>
    %81 = arith.addf %75, %80 : vector<8x252xf32>
    %82 = vector.extract_strided_slice %60 {offsets = [3, 0], sizes = [1, 252], strides = [1, 1]} : vector<8x252xf32> to vector<1x252xf32>
    %83 = vector.extract_strided_slice %61 {offsets = [0, 3], sizes = [8, 1], strides = [1, 1]} : vector<8x4xf32> to vector<8x1xf32>
    %84 = vector.broadcast %83 : vector<8x1xf32> to vector<8x252xf32>
    %85 = vector.broadcast %82 : vector<1x252xf32> to vector<8x252xf32>
    %86 = arith.mulf %84, %85 : vector<8x252xf32>
    %87 = arith.addf %81, %86 : vector<8x252xf32>
    %88 = vector.broadcast %62 : vector<8x1xf32> to vector<8x252xf32>
    %89 = arith.addf %87, %88 : vector<8x252xf32>
    %cst_13 = arith.constant 0.000000e+00 : f32
    %90 = vector.broadcast %cst_13 : f32 to vector<8x252xf32>
    %91 = vector.extract_strided_slice %60 {offsets = [4, 0], sizes = [1, 252], strides = [1, 1]} : vector<8x252xf32> to vector<1x252xf32>
    %92 = vector.extract_strided_slice %61 {offsets = [0, 0], sizes = [8, 1], strides = [1, 1]} : vector<8x4xf32> to vector<8x1xf32>
    %93 = vector.broadcast %92 : vector<8x1xf32> to vector<8x252xf32>
    %94 = vector.broadcast %91 : vector<1x252xf32> to vector<8x252xf32>
    %95 = arith.mulf %93, %94 : vector<8x252xf32>
    %96 = arith.addf %90, %95 : vector<8x252xf32>
    %97 = vector.extract_strided_slice %60 {offsets = [5, 0], sizes = [1, 252], strides = [1, 1]} : vector<8x252xf32> to vector<1x252xf32>
    %98 = vector.extract_strided_slice %61 {offsets = [0, 1], sizes = [8, 1], strides = [1, 1]} : vector<8x4xf32> to vector<8x1xf32>
    %99 = vector.broadcast %98 : vector<8x1xf32> to vector<8x252xf32>
    %100 = vector.broadcast %97 : vector<1x252xf32> to vector<8x252xf32>
    %101 = arith.mulf %99, %100 : vector<8x252xf32>
    %102 = arith.addf %96, %101 : vector<8x252xf32>
    %103 = vector.extract_strided_slice %60 {offsets = [6, 0], sizes = [1, 252], strides = [1, 1]} : vector<8x252xf32> to vector<1x252xf32>
    %104 = vector.extract_strided_slice %61 {offsets = [0, 2], sizes = [8, 1], strides = [1, 1]} : vector<8x4xf32> to vector<8x1xf32>
    %105 = vector.broadcast %104 : vector<8x1xf32> to vector<8x252xf32>
    %106 = vector.broadcast %103 : vector<1x252xf32> to vector<8x252xf32>
    %107 = arith.mulf %105, %106 : vector<8x252xf32>
    %108 = arith.addf %102, %107 : vector<8x252xf32>
    %109 = vector.extract_strided_slice %60 {offsets = [7, 0], sizes = [1, 252], strides = [1, 1]} : vector<8x252xf32> to vector<1x252xf32>
    %110 = vector.extract_strided_slice %61 {offsets = [0, 3], sizes = [8, 1], strides = [1, 1]} : vector<8x4xf32> to vector<8x1xf32>
    %111 = vector.broadcast %110 : vector<8x1xf32> to vector<8x252xf32>
    %112 = vector.broadcast %109 : vector<1x252xf32> to vector<8x252xf32>
    %113 = arith.mulf %111, %112 : vector<8x252xf32>
    %114 = arith.addf %108, %113 : vector<8x252xf32>
    %115 = vector.broadcast %62 : vector<8x1xf32> to vector<8x252xf32>
    %116 = arith.addf %114, %115 : vector<8x252xf32>
    %117 = tpu.concatenate %89, %116 in 0 : vector<8x252xf32>, vector<8x252xf32> -> vector<16x252xf32>
    %c0_14 = arith.constant 0 : index
    %c0_15 = arith.constant 0 : index
    %c0_16 = arith.constant 0 : index
    %118 = vector.load %arg7[%c0_14, %c0_15, %c0_16] : memref<1x16x252xf32, #tpu.memory_space<vmem>>, vector<1x16x252xf32>
    %119 = vector.shape_cast %118 : vector<1x16x252xf32> to vector<16x252xf32>
    %120 = vector.shape_cast %117 : vector<16x252xf32> to vector<1x16x252xf32>
    tpu.vector_store %arg7[%c0_14, %c0_15, %c0_16], %120 {strides = array<i32>} : memref<1x16x252xf32, #tpu.memory_space<vmem>>, vector<1x16x252xf32>,
    return
  }
  func.func @transform_0(%arg0: i32, %arg1: i32) -> (i32, i32, i32) {
    %c0_i32 = arith.constant 0 : i32
    %c0_i32_0 = arith.constant 0 : i32
    return %arg0, %c0_i32, %arg1 : i32, i32, i32
  }
  func.func @transform_1(%arg0: i32, %arg1: i32) -> (i32, i32, i32) {
    %c0_i32 = arith.constant 0 : i32
    %c0_i32_0 = arith.constant 0 : i32
    return %arg0, %c0_i32, %arg1 : i32, i32, i32
  }
  func.func @transform_2(%arg0: i32, %arg1: i32) -> (i32, i32, i32) {
    %c0_i32 = arith.constant 0 : i32
    %c0_i32_0 = arith.constant 0 : i32
    %c0_i32_1 = arith.constant 0 : i32
    %c0_i32_2 = arith.constant 0 : i32
    return %c0_i32, %c0_i32_0, %c0_i32_1 : i32, i32, i32
  }
  func.func @transform_3(%arg0: i32, %arg1: i32) -> (i32, i32) {
    %c0_i32 = arith.constant 0 : i32
    %c0_i32_0 = arith.constant 0 : i32
    %c0_i32_1 = arith.constant 0 : i32
    return %c0_i32, %c0_i32_0 : i32, i32
  }
  func.func @transform_4(%arg0: i32, %arg1: i32) -> (i32, i32) {
    %c0_i32 = arith.constant 0 : i32
    %c0_i32_0 = arith.constant 0 : i32
    %c0_i32_1 = arith.constant 0 : i32
    return %c0_i32, %c0_i32_0 : i32, i32
  }
  func.func @transform_5(%arg0: i32, %arg1: i32) -> (i32, i32, i32) {
    %c0_i32 = arith.constant 0 : i32
    %c0_i32_0 = arith.constant 0 : i32
    return %arg0, %c0_i32, %arg1 : i32, i32, i32
  }
}

</mosaic_0001>

<llo_original>
// kernel: tpu_custom_call.1
$region0: #{tpu_custom_call.1}
  #allocation0 [shape = 'u32[]', space=smem, size = 0x4, offset = 0x4, fixed_abs, tag = 'smem constant byte address 0x4 - core index']
  #allocation1 [shape = 'u32[144,128]{1,0:T(1,128)}', space=vmem, size = 0x12000, scoped, tag = 'internal scratch']
  %s0 = inlined_call_operand.vmem [shape: f32[1,8,252], index: 0, kind: input, shape index: {}]
  %s1 = inlined_call_operand.vmem [shape: f32[1,8,128], index: 1, kind: input, shape index: {}]
  %s2 = inlined_call_operand.vmem [shape: f32[9,8,1], index: 2, kind: input, shape index: {}]
  %s3 = inlined_call_operand.vmem [shape: f32[8,4], index: 3, kind: input, shape index: {}]
  %s4 = inlined_call_operand.vmem [shape: f32[8,1], index: 4, kind: input, shape index: {}]
  %s5 = inlined_call_operand.hbm [shape: f32[1,16,252], index: 5, kind: output, shape index: {}]
  %s6 = sld [smem:[#allocation0]]
  $region30: #{tpu_custom_call.1} parent=0
    _
  %s8 = ssub.s32 1, %s6
  %s9 = scalar_select 0, %s8, %s6
  $region1: #{tpu_custom_call.1} parent=0
    #allocation2 [shape = 'u8[16384]{0}', space=vmem, size = 0x4000, scoped, tag = 'output window, operand 0, single buffered']
    #allocation3 [shape = 's32[1]{0}', space=sflag, size = 0x4, scoped, tag = 'scoped memory for tpu_custom_call.1']
    %10 = vsyncpa [#allocation3], 0
    // Predicated region
    $region2: #{tpu_custom_call.1} parent=1 // pred_check
      _
    $region3: #{tpu_custom_call.1} parent=1 // pred_check_branch
      %12 = sbr.rel (0) target = $region5
    $region4: #{tpu_custom_call.1} parent=1 // pred_region
      _
    $region5: #{tpu_custom_call.1} parent=1 // pred_fallthru
      _
    // Predicated region
    $region6: #{tpu_custom_call.1} parent=1 // pred_check
      _
    $region7: #{tpu_custom_call.1} parent=1 // pred_check_branch
      %14 = sbr.rel (0) target = $region9
    $region8: #{tpu_custom_call.1} parent=1 // pred_region
      _
    $region9: #{tpu_custom_call.1} parent=1 // pred_fallthru
      _
    // Predicated region
    $region10: #{tpu_custom_call.1} parent=1 // pred_check
      _
    $region11: #{tpu_custom_call.1} parent=1 // pred_check_branch
      %16 = sbr.rel (0) target = $region13
    $region12: #{tpu_custom_call.1} parent=1 // pred_region
      _
    $region13: #{tpu_custom_call.1} parent=1 // pred_fallthru
      _
    // Predicated region
    $region14: #{tpu_custom_call.1} parent=1 // pred_check
      _
    $region15: #{tpu_custom_call.1} parent=1 // pred_check_branch
      %18 = sbr.rel (0) target = $region17
    $region16: #{tpu_custom_call.1} parent=1 // pred_region
      _
    $region17: #{tpu_custom_call.1} parent=1 // pred_fallthru
      _
    // Predicated region
    $region18: #{tpu_custom_call.1} parent=1 // pred_check
      _
    $region19: #{tpu_custom_call.1} parent=1 // pred_check_branch
      %20 = sbr.rel (0) target = $region21
    $region20: #{tpu_custom_call.1} parent=1 // pred_region
      _
    $region21: #{tpu_custom_call.1} parent=1 // pred_fallthru
      _
    %v21 = vld [vmem:[%s0] sm:$0xff]
    %v22 = vld [vmem:[%s0 + $0x8] sm:$0xff]
    %v23 = vld [vmem:[%s1] sm:$0xff]
    %25 = vrot.lane.b32.xlu0 %v23, 124
    %v26 = vpop.permute.xlu0 %25
    %vm28 = vcmask 1014784
    %v29 = vsel %vm28, %v22, %v26
    %v30 = vld [vmem:[%s2] sm:$0xff]
    %v31 = vld [vmem:[%s2 + $0x8] sm:$0xff]
    %v32 = vld [vmem:[%s2 + $0x10] sm:$0xff]
    %v33 = vld [vmem:[%s2 + $0x18] sm:$0xff]
    %v34 = vld [vmem:[%s2 + $0x20] sm:$0xff]
    %v35 = vld [vmem:[%s2 + $0x28] sm:$0xff]
    %v36 = vld [vmem:[%s2 + $0x30] sm:$0xff]
    %v37 = vld [vmem:[%s2 + $0x38] sm:$0xff]
    %v38 = vld [vmem:[%s2 + $0x40] sm:$0xff]
    %40 = vset.pattern.permute.xlu0 0
    %41 = vperm.xlu0 %40, %v30
    %v42 = vpop.permute.xlu0 %41
    %v44 = vmul.f32 %v21, %v42
    %v45 = vmul.f32 %v29, %v42
    %v46 = vadd.f32 %v44, 0.0
    %v47 = vadd.f32 %v45, 0.0
    %49 = vset.pattern.permute.xlu0 0
    %50 = vperm.xlu0 %49, %v31
    %v51 = vpop.permute.xlu0 %50
    %v53 = vmul.f32 %v21, %v51
    %v54 = vmul.f32 %v29, %v51
    %57 = vrot.lane.b32.xlu0 %v53, 126
    %v58 = vpop.permute.xlu0 %57
    %59 = vrot.lane.b32.xlu0 %v54, 126
    %v60 = vpop.permute.xlu0 %59
    %vm61 = vcmask 1031168
    %v62 = vsel %vm61, %v58, %v60
    %v65 = vadd.f32 %v46, %v62
    %v66 = vadd.f32 %v47, %v60
    %68 = vset.pattern.permute.xlu0 0
    %69 = vperm.xlu0 %68, %v32
    %v70 = vpop.permute.xlu0 %69
    %v72 = vmul.f32 %v21, %v70
    %v73 = vmul.f32 %v29, %v70
    %76 = vrot.lane.b32.xlu0 %v72, 124
    %v77 = vpop.permute.xlu0 %76
    %78 = vrot.lane.b32.xlu0 %v73, 124
    %v79 = vpop.permute.xlu0 %78
    %v80 = vsel %vm28, %v77, %v79
    %v83 = vadd.f32 %v65, %v80
    %v84 = vadd.f32 %v66, %v79
    %86 = vset.pattern.permute.xlu0 0
    %87 = vperm.xlu0 %86, %v33
    %v88 = vpop.permute.xlu0 %87
    %v90 = vmul.f32 %v21, %v88
    %v91 = vmul.f32 %v29, %v88
    %v92 = vmul.f32 %v26, %v88
    %96 = vrot.lane.b32.xlu0 %v90, 92
    %v97 = vpop.permute.xlu0 %96
    %98 = vrot.lane.b32.xlu0 %v91, 92
    %v99 = vpop.permute.xlu0 %98
    %100 = vrot.lane.b32.xlu0 %v92, 92
    %v101 = vpop.permute.xlu0 %100
    %vm102 = vcmask 752640
    %v103 = vsel %vm102, %v97, %v99
    %v104 = vsel %vm102, %v99, %v101
    %v107 = vadd.f32 %v83, %v103
    %v108 = vadd.f32 %v84, %v104
    %110 = vset.pattern.permute.xlu0 0
    %111 = vperm.xlu0 %110, %v34
    %v112 = vpop.permute.xlu0 %111
    %v114 = vmul.f32 %v21, %v112
    %v115 = vmul.f32 %v29, %v112
    %v116 = vmul.f32 %v26, %v112
    %120 = vrot.lane.b32.xlu0 %v114, 90
    %v121 = vpop.permute.xlu0 %120
    %122 = vrot.lane.b32.xlu0 %v115, 90
    %v123 = vpop.permute.xlu0 %122
    %124 = vrot.lane.b32.xlu0 %v116, 90
    %v125 = vpop.permute.xlu0 %124
    %vm126 = vcmask 736256
    %v127 = vsel %vm126, %v121, %v123
    %v128 = vsel %vm126, %v123, %v125
    %v131 = vadd.f32 %v107, %v127
    %v132 = vadd.f32 %v108, %v128
    %134 = vset.pattern.permute.xlu0 0
    %135 = vperm.xlu0 %134, %v35
    %v136 = vpop.permute.xlu0 %135
    %v138 = vmul.f32 %v21, %v136
    %v139 = vmul.f32 %v29, %v136
    %v140 = vmul.f32 %v26, %v136
    %144 = vrot.lane.b32.xlu0 %v138, 88
    %v145 = vpop.permute.xlu0 %144
    %146 = vrot.lane.b32.xlu0 %v139, 88
    %v147 = vpop.permute.xlu0 %146
    %148 = vrot.lane.b32.xlu0 %v140, 88
    %v149 = vpop.permute.xlu0 %148
    %vm150 = vcmask 719872
    %v151 = vsel %vm150, %v145, %v147
    %v152 = vsel %vm150, %v147, %v149
    %v155 = vadd.f32 %v131, %v151
    %v156 = vadd.f32 %v132, %v152
    %158 = vset.pattern.permute.xlu0 0
    %159 = vperm.xlu0 %158, %v36
    %v160 = vpop.permute.xlu0 %159
    %v162 = vmul.f32 %v21, %v160
    %v163 = vmul.f32 %v29, %v160
    %v164 = vmul.f32 %v26, %v160
    %168 = vrot.lane.b32.xlu0 %v162, 56
    %v169 = vpop.permute.xlu0 %168
    %170 = vrot.lane.b32.xlu0 %v163, 56
    %v171 = vpop.permute.xlu0 %170
    %172 = vrot.lane.b32.xlu0 %v164, 56
    %v173 = vpop.permute.xlu0 %172
    %vm174 = vcmask 457728
    %v175 = vsel %vm174, %v169, %v171
    %v176 = vsel %vm174, %v171, %v173
    %v179 = vadd.f32 %v155, %v175
    %v180 = vadd.f32 %v156, %v176
    %182 = vset.pattern.permute.xlu0 0
    %183 = vperm.xlu0 %182, %v37
    %v184 = vpop.permute.xlu0 %183
    %v186 = vmul.f32 %v21, %v184
    %v187 = vmul.f32 %v29, %v184
    %v188 = vmul.f32 %v26, %v184
    %192 = vrot.lane.b32.xlu0 %v186, 54
    %v193 = vpop.permute.xlu0 %192
    %194 = vrot.lane.b32.xlu0 %v187, 54
    %v195 = vpop.permute.xlu0 %194
    %196 = vrot.lane.b32.xlu0 %v188, 54
    %v197 = vpop.permute.xlu0 %196
    %vm198 = vcmask 441344
    %v199 = vsel %vm198, %v193, %v195
    %v200 = vsel %vm198, %v195, %v197
    %v203 = vadd.f32 %v179, %v199
    %v204 = vadd.f32 %v180, %v200
    %206 = vset.pattern.permute.xlu0 0
    %207 = vperm.xlu0 %206, %v38
    %v208 = vpop.permute.xlu0 %207
    %v210 = vmul.f32 %v21, %v208
    %v211 = vmul.f32 %v29, %v208
    %v212 = vmul.f32 %v26, %v208
    %216 = vrot.lane.b32.xlu0 %v210, 52
    %v217 = vpop.permute.xlu0 %216
    %218 = vrot.lane.b32.xlu0 %v211, 52
    %v219 = vpop.permute.xlu0 %218
    %220 = vrot.lane.b32.xlu0 %v212, 52
    %v221 = vpop.permute.xlu0 %220
    %vm222 = vcmask 424960
    %v223 = vsel %vm222, %v217, %v219
    %v224 = vsel %vm222, %v219, %v221
    %v227 = vadd.f32 %v203, %v223
    %v228 = vadd.f32 %v204, %v224
    %v229 = vld [vmem:[%s3] sm:$0xff]
    %v230 = vld [vmem:[%s4] sm:$0xff]
    %232 = vset.pattern.permute.xlu0 0
    %233 = vperm.xlu0 %232, %v229
    %v234 = vpop.permute.xlu0 %233
    %v236 = vlaneseq
    %v237 = vshrl.u32 %v236, 7
    %v238 = vsub.s32 0, %v237
    %v239 = vrot.slane %v227, %v238
    %v240 = vlaneseq
    %v241 = vshrl.u32 %v240, 7
    %v242 = vsub.s32 0, %v241
    %v243 = vrot.slane %v228, %v242
    %v244 = vmul.f32 %v234, %v239
    %v245 = vmul.f32 %v234, %v243
    %v246 = vadd.f32 %v244, 0.0
    %v247 = vadd.f32 %v245, 0.0
    %248 = vset.pattern.permute.xlu0 1
    %249 = vperm.xlu0 %248, %v229
    %v250 = vpop.permute.xlu0 %249
    %v252 = vlaneseq
    %v253 = vshrl.u32 %v252, 7
    %v254 = vsub.s32 1, %v253
    %v255 = vrot.slane %v227, %v254
    %v256 = vlaneseq
    %v257 = vshrl.u32 %v256, 7
    %v258 = vsub.s32 1, %v257
    %v259 = vrot.slane %v228, %v258
    %v260 = vmul.f32 %v250, %v255
    %v261 = vmul.f32 %v250, %v259
    %v262 = vadd.f32 %v246, %v260
    %v263 = vadd.f32 %v247, %v261
    %264 = vset.pattern.permute.xlu0 2
    %265 = vperm.xlu0 %264, %v229
    %v266 = vpop.permute.xlu0 %265
    %v268 = vlaneseq
    %v269 = vshrl.u32 %v268, 7
    %v270 = vsub.s32 2, %v269
    %v271 = vrot.slane %v227, %v270
    %v272 = vlaneseq
    %v273 = vshrl.u32 %v272, 7
    %v274 = vsub.s32 2, %v273
    %v275 = vrot.slane %v228, %v274
    %v276 = vmul.f32 %v266, %v271
    %v277 = vmul.f32 %v266, %v275
    %v278 = vadd.f32 %v262, %v276
    %v279 = vadd.f32 %v263, %v277
    %280 = vset.pattern.permute.xlu0 3
    %281 = vperm.xlu0 %280, %v229
    %v282 = vpop.permute.xlu0 %281
    %v284 = vlaneseq
    %v285 = vshrl.u32 %v284, 7
    %v286 = vsub.s32 3, %v285
    %v287 = vrot.slane %v227, %v286
    %v288 = vlaneseq
    %v289 = vshrl.u32 %v288, 7
    %v290 = vsub.s32 3, %v289
    %v291 = vrot.slane %v228, %v290
    %v292 = vmul.f32 %v282, %v287
    %v293 = vmul.f32 %v282, %v291
    %v294 = vadd.f32 %v278, %v292
    %v295 = vadd.f32 %v279, %v293
    %297 = vset.pattern.permute.xlu0 0
    %298 = vperm.xlu0 %297, %v230
    %v299 = vpop.permute.xlu0 %298
    %v301 = vadd.f32 %v294, %v299
    %v302 = vadd.f32 %v295, %v299
    %v303 = vlaneseq
    %v304 = vshrl.u32 %v303, 7
    %v305 = vsub.s32 4, %v304
    %v306 = vrot.slane %v227, %v305
    %v307 = vlaneseq
    %v308 = vshrl.u32 %v307, 7
    %v309 = vsub.s32 4, %v308
    %v310 = vrot.slane %v228, %v309
    %v311 = vmul.f32 %v234, %v306
    %v312 = vmul.f32 %v234, %v310
    %v313 = vadd.f32 %v311, 0.0
    %v314 = vadd.f32 %v312, 0.0
    %v315 = vlaneseq
    %v316 = vshrl.u32 %v315, 7
    %v317 = vsub.s32 5, %v316
    %v318 = vrot.slane %v227, %v317
    %v319 = vlaneseq
    %v320 = vshrl.u32 %v319, 7
    %v321 = vsub.s32 5, %v320
    %v322 = vrot.slane %v228, %v321
    %v323 = vmul.f32 %v250, %v318
    %v324 = vmul.f32 %v250, %v322
    %v325 = vadd.f32 %v313, %v323
    %v326 = vadd.f32 %v314, %v324
    %v327 = vlaneseq
    %v328 = vshrl.u32 %v327, 7
    %v329 = vsub.s32 6, %v328
    %v330 = vrot.slane %v227, %v329
    %v331 = vlaneseq
    %v332 = vshrl.u32 %v331, 7
    %v333 = vsub.s32 6, %v332
    %v334 = vrot.slane %v228, %v333
    %v335 = vmul.f32 %v266, %v330
    %v336 = vmul.f32 %v266, %v334
    %v337 = vadd.f32 %v325, %v335
    %v338 = vadd.f32 %v326, %v336
    %v339 = vlaneseq
    %v340 = vshrl.u32 %v339, 7
    %v341 = vsub.s32 7, %v340
    %v342 = vrot.slane %v227, %v341
    %v343 = vlaneseq
    %v344 = vshrl.u32 %v343, 7
    %v345 = vsub.s32 7, %v344
    %v346 = vrot.slane %v228, %v345
    %v347 = vmul.f32 %v282, %v342
    %v348 = vmul.f32 %v282, %v346
    %v349 = vadd.f32 %v337, %v347
    %v350 = vadd.f32 %v338, %v348
    %v351 = vadd.f32 %v349, %v299
    %v352 = vadd.f32 %v350, %v299
    %353 = vst [vmem:[#allocation2] sm:$0xff] %v301
    %354 = vst.msk [vmem:[#allocation2 + $0x8] sm:$0xff] %vm28, %v302
    %355 = vst [vmem:[#allocation2 + $0x10] sm:$0xff] %v351
    %356 = vst.msk [vmem:[#allocation2 + $0x18] sm:$0xff] %vm28, %v352
    // Predicated region
    $region22: #{tpu_custom_call.1} parent=1 // pred_check
      _
    $region23: #{tpu_custom_call.1} parent=1 // pred_check_branch
      %358 = sbr.rel (0) target = $region25
    $region24: #{tpu_custom_call.1} parent=1 // pred_region
      %s360 = ssub.s32 512, 512
      %361 = vsyncadd [#allocation3], %s360
      %s362 = sshll.u32 [#allocation2], 4
      %s363 = int_to_ptr.vmem [resolvable:$true] %s362
      %368 = dma.vmem_to_hbm [thread:$0]  %s363, 512, %s5, [#allocation3], 256, 256, 16
    $region25: #{tpu_custom_call.1} parent=1 // pred_fallthru
      _
    // Predicated region
    $region26: #{tpu_custom_call.1} parent=1 // pred_check
      _
    $region27: #{tpu_custom_call.1} parent=1 // pred_check_branch
      %370 = sbr.rel (0) target = $region29
    $region28: #{tpu_custom_call.1} parent=1 // pred_region
      %371 = dma.done [#allocation3], 512
    $region29: #{tpu_custom_call.1} parent=1 // pred_fallthru
      _
    %372 = vsyncpa [#allocation3], 1

</llo_original>
